<compile_context>
chip_gen: v7x
topology: tpu7x:2x2x1
jax: 0.10.0
libtpu: 0.0.40
codegen_flags: <defaults>
</compile_context>

<pallas_src>
import jax
import jax.numpy as jnp
from jax.experimental import pallas as pl
from jax.experimental.pallas import tpu as pltpu

LN_EPS = 1e-5
LANE = 128
SUBLANE = 8
TILE_B_MAX = 1024   # review: 1024-2048; keep <= 4096 for v7x's 64 MiB VMEM


def _round_up(n, m):
    return ((n + m - 1) // m) * m


def _cdiv(a, b):
    return (a + b - 1) // b


def _mish(h, recip=lambda v: 1.0 / v):
    # PyTorch Mish: x * tanh(softplus(x)).
    # Identity: tanh(log(1+exp(x))) = (w - 1) / (w + 1), w = (1 + exp(x))^2.
    # Single transcendental; clamp at 20 (there mish(x) ~= x and exp would blow up).
    e = jnp.exp(jnp.minimum(h, 20.0))
    w = (1.0 + e) * (1.0 + e)
    return h * (w - 1.0) * recip(w + 1.0)


def _layernorm_fused(h, gamma, beta, n_true, n_pad):
    # Two-pass (centered) LayerNorm over the last axis.
    # Padded lanes of h are exactly zero by construction, so:
    #   * sum(h) over the padded width == sum over the true width,
    #   * sum((h-mu)^2) over-counts by (n_pad - n_true) * mu^2, subtracted exactly.
    # gamma/beta MUST be zero-padded (NOT ones) so padded lanes stay exactly 0.
    inv_n = 1.0 / float(n_true)
    mu = jnp.sum(h, axis=-1, keepdims=True) * inv_n
    hc = h - mu
    ssq = jnp.sum(hc * hc, axis=-1, keepdims=True)
    var = (ssq - float(n_pad - n_true) * (mu * mu)) * inv_n
    return hc * jax.lax.rsqrt(var + LN_EPS) * gamma + beta


def _make_kernel(mid_true, dim_pad, mid_pad, hid_pad):
    recip = lambda v: pl.reciprocal(v, approx=True)

    def kernel(x_ref, w1_ref, w2_ref, w3_ref, w4_ref, vec_ref, out_ref):
        x = x_ref[...]                                 # [TILE_B, dim_pad] bf16
        vec = vec_ref[...]                             # [8, F] f32 (packed vectors)

        b1, g1, be1 = vec[0:1, :mid_pad], vec[1:2, :mid_pad], vec[2:3, :mid_pad]
        b2 = vec[3:4, :hid_pad]
        b3, g2, be2 = vec[4:5, :mid_pad], vec[5:6, :mid_pad], vec[6:7, :mid_pad]
        b4 = vec[7:8, :dim_pad]

        # ---- Encoder MLP: Linear -> LayerNorm -> Mish -> Linear ----
        h = jnp.dot(x, w1_ref[...], preferred_element_type=jnp.float32) + b1
        h = _mish(_layernorm_fused(h, g1, be1, mid_true, mid_pad), recip)
        z = jnp.dot(h.astype(jnp.bfloat16), w2_ref[...],
                    preferred_element_type=jnp.float32) + b2

        # ---- Decoder MLP: Linear -> LayerNorm -> Mish -> Linear ----
        d = jnp.dot(z.astype(jnp.bfloat16), w3_ref[...],
                    preferred_element_type=jnp.float32) + b3
        d = _mish(_layernorm_fused(d, g2, be2, mid_true, mid_pad), recip)
        y = jnp.dot(d.astype(jnp.bfloat16), w4_ref[...],
                    preferred_element_type=jnp.float32) + b4

        out_ref[...] = y.astype(out_ref.dtype)         # [TILE_B, dim_pad] bf16
    return kernel


def init_params(key, dim, hidden_dim, midmult=1.0):
    mid = int(midmult * (dim + hidden_dim) // 2)
    ks = jax.random.split(key, 4)

    def lin(k, fan_in, fan_out):
        bound = 1.0 / (fan_in ** 0.5)
        kw, kb = jax.random.split(k)
        w = jax.random.uniform(kw, (fan_in, fan_out), jnp.float32, -bound, bound)
        b = jax.random.uniform(kb, (fan_out,), jnp.float32, -bound, bound)
        return w, b

    w1, b1 = lin(ks[0], dim, mid)
    w2, b2 = lin(ks[1], mid, hidden_dim)
    w3, b3 = lin(ks[2], hidden_dim, mid)
    w4, b4 = lin(ks[3], mid, dim)
    ones = jnp.ones((mid,), jnp.float32)
    zeros = jnp.zeros((mid,), jnp.float32)
    return dict(w1=w1, b1=b1, g1=ones, be1=zeros, w2=w2, b2=b2,
                w3=w3, b3=b3, g2=ones, be2=zeros, w4=w4, b4=b4, mid=mid)


def pack_params(params, dim, hidden_dim):
    """Zero-pad feature dims to multiples of 128, cast weights to bf16,
    pack the 8 per-layer vectors into one [8, F] f32 array.

    NOTE (invariant): gamma/beta are ZERO-padded. The kernel relies on padded
    lanes of every activation staying exactly 0; padding gamma with ones would
    silently break LayerNorm statistics of downstream layers.
    """
    mid = params["mid"]
    dim_pad = _round_up(dim, LANE)
    mid_pad = _round_up(mid, LANE)
    hid_pad = _round_up(hidden_dim, LANE)
    fmax = max(dim_pad, mid_pad, hid_pad)

    def pad_w(w, r, c):
        return jnp.pad(w, ((0, r - w.shape[0]), (0, c - w.shape[1]))).astype(jnp.bfloat16)

    def pad_v(v):
        return jnp.pad(v, (0, fmax - v.shape[0]))      # zero padding (required)

    packed = dict(
        w1=pad_w(params["w1"], dim_pad, mid_pad),
        w2=pad_w(params["w2"], mid_pad, hid_pad),
        w3=pad_w(params["w3"], hid_pad, mid_pad),
        w4=pad_w(params["w4"], mid_pad, dim_pad),
        vec=jnp.stack([pad_v(params["b1"]), pad_v(params["g1"]), pad_v(params["be1"]),
                       pad_v(params["b2"]),
                       pad_v(params["b3"]), pad_v(params["g2"]), pad_v(params["be2"]),
                       pad_v(params["b4"])], axis=0),   # [8, fmax] f32
    )
    meta = dict(dim=dim, hidden=hidden_dim, mid=mid,
                dim_pad=dim_pad, mid_pad=mid_pad, hid_pad=hid_pad, fmax=fmax)
    return packed, meta


def mlpae_forward(x, packed, meta, n_agents):
    dim, dim_pad = meta["dim"], meta["dim_pad"]
    mid_pad, hid_pad = meta["mid_pad"], meta["hid_pad"]

    B = x.shape[0] // n_agents

    # --- batch tiling ---
    # Big tiles amortize the fixed ~0.35us per-grid-step pipeline cost; keep >=2
    # grid steps for large B so megacore (v7x) can shard the "parallel" axis.
    # Pad the batch only to n_steps * tile_b (<= 8*n_steps wasted rows), not to a
    # full multiple of a fixed tile size.
    if B >= 256:
        n_steps = max(2, _cdiv(B, TILE_B_MAX))
    else:
        n_steps = 1
    tile_b = min(TILE_B_MAX, _round_up(_cdiv(B, n_steps), SUBLANE))
    b_pad = n_steps * tile_b

    # bf16 input: cast + pad fuse into one XLA op; halves input HBM traffic.
    x2p = jnp.pad(x.reshape(B, dim).astype(jnp.bfloat16),
                  ((0, b_pad - B), (0, dim_pad - dim)))

    kernel = _make_kernel(meta["mid"], dim_pad, mid_pad, hid_pad)

    flops = 2 * b_pad * (dim_pad * mid_pad + mid_pad * hid_pad
                         + hid_pad * mid_pad + mid_pad * dim_pad)
    transcendentals = 2 * b_pad * mid_pad              # one exp per Mish element
    bytes_accessed = (2 * b_pad * dim_pad * 2          # bf16 x in + bf16 y out
                      + 2 * (dim_pad * mid_pad + mid_pad * hid_pad
                             + hid_pad * mid_pad + mid_pad * dim_pad)
                      + 4 * 8 * meta["fmax"])

    def const_spec(arr):
        # Constant index_map: the pipeliner keeps these blocks resident in VMEM
        # (no per-step re-DMA of the weights / packed vectors).
        return pl.BlockSpec(arr.shape, lambda i: (0, 0))

    y = pl.pallas_call(
        kernel,
        out_shape=jax.ShapeDtypeStruct((b_pad, dim_pad), jnp.bfloat16),
        grid=(n_steps,),
        in_specs=[pl.BlockSpec((tile_b, dim_pad), lambda i: (i, 0)),
                  const_spec(packed["w1"]), const_spec(packed["w2"]),
                  const_spec(packed["w3"]), const_spec(packed["w4"]),
                  const_spec(packed["vec"])],
        out_specs=pl.BlockSpec((tile_b, dim_pad), lambda i: (i, 0)),
        compiler_params=pltpu.CompilerParams(
            dimension_semantics=("parallel",),
            vmem_limit_bytes=32 * 1024 * 1024),
        cost_estimate=pl.CostEstimate(flops=flops,
                                      transcendentals=transcendentals,
                                      bytes_accessed=bytes_accessed),
    )(x2p, packed["w1"], packed["w2"], packed["w3"], packed["w4"], packed["vec"])

    # Slice off batch/feature padding; return f32 like the PyTorch module.
    x_hat = y[:B, :dim].astype(jnp.float32).reshape(B * n_agents, -1)
    return x_hat, None


def reference_forward(x, packed, meta, n_agents):
    # Pure-JAX mirror of the kernel math (same padding / bf16 casts / fused LN),
    # exact reciprocal instead of the approx EUP one.
    dim, mid = meta["dim"], meta["mid"]
    dim_pad, mid_pad, hid_pad = meta["dim_pad"], meta["mid_pad"], meta["hid_pad"]
    B = x.shape[0] // n_agents
    x2 = jnp.pad(x.reshape(B, dim).astype(jnp.bfloat16), ((0, 0), (0, dim_pad - dim)))

    vec = packed["vec"]
    b1, g1, be1 = vec[0:1, :mid_pad], vec[1:2, :mid_pad], vec[2:3, :mid_pad]
    b2 = vec[3:4, :hid_pad]
    b3, g2, be2 = vec[4:5, :mid_pad], vec[5:6, :mid_pad], vec[6:7, :mid_pad]
    b4 = vec[7:8, :dim_pad]

    h = jnp.dot(x2, packed["w1"], preferred_element_type=jnp.float32) + b1
    h = _mish(_layernorm_fused(h, g1, be1, mid, mid_pad))
    z = jnp.dot(h.astype(jnp.bfloat16), packed["w2"], preferred_element_type=jnp.float32) + b2
    d = jnp.dot(z.astype(jnp.bfloat16), packed["w3"], preferred_element_type=jnp.float32) + b3
    d = _mish(_layernorm_fused(d, g2, be2, mid, mid_pad))
    y = jnp.dot(d.astype(jnp.bfloat16), packed["w4"], preferred_element_type=jnp.float32) + b4
    y = y.astype(jnp.bfloat16)
    return y[:, :dim].astype(jnp.float32).reshape(B * n_agents, -1)


if __name__ == "__main__":
    # Small, module-consistent shapes.
    n_agents = 4
    dim = 32            # concatenated per-batch feature dim (n_agents * 8)
    hidden_dim = 16
    B = 2

    key = jax.random.PRNGKey(0)
    kx, kp = jax.random.split(key)
    x = jax.random.normal(kx, (B * n_agents, dim // n_agents), jnp.float32)

    params = init_params(kp, dim, hidden_dim)
    packed, meta = pack_params(params, dim, hidden_dim)

    x_hat, _ = mlpae_forward(x, packed, meta, n_agents)
    x_hat = jax.block_until_ready(x_hat)

    ref = reference_forward(x, packed, meta, n_agents)
    assert x_hat.shape == (B * n_agents, dim // n_agents)
    assert jnp.allclose(x_hat, ref, atol=3e-2, rtol=3e-2), \
        float(jnp.max(jnp.abs(x_hat - ref)))

    print("KERNEL_OK")
</pallas_src>

<mosaic_0001>
module attributes {stable_mosaic.version = 11 : i64} {
  func.func @kernel(%arg0: i32, %arg1: memref<8x128xbf16, #tpu.memory_space<vmem>>, %arg2: memref<128x128xbf16, #tpu.memory_space<vmem>>, %arg3: memref<128x128xbf16, #tpu.memory_space<vmem>>, %arg4: memref<128x128xbf16, #tpu.memory_space<vmem>>, %arg5: memref<128x128xbf16, #tpu.memory_space<vmem>>, %arg6: memref<8x128xf32, #tpu.memory_space<vmem>>, %arg7: memref<8x128xbf16, #tpu.memory_space<vmem>>) attributes {dimension_semantics = [#tpu.dimension_semantics<parallel>], iteration_bounds = array<i64: 1>, scalar_prefetch = 0 : i64, scratch_operands = 0 : i64, tpu.core_type = #tpu.core_type<tc>, window_params = [{transform_indices = @transform_0, window_bounds = array<i64: 8, 128>}, {pipeline_mode = #tpu.pipeline_mode<synchronous>, transform_indices = @transform_1, window_bounds = array<i64: 128, 128>}, {pipeline_mode = #tpu.pipeline_mode<synchronous>, transform_indices = @transform_2, window_bounds = array<i64: 128, 128>}, {pipeline_mode = #tpu.pipeline_mode<synchronous>, transform_indices = @transform_3, window_bounds = array<i64: 128, 128>}, {pipeline_mode = #tpu.pipeline_mode<synchronous>, transform_indices = @transform_4, window_bounds = array<i64: 128, 128>}, {pipeline_mode = #tpu.pipeline_mode<synchronous>, transform_indices = @transform_5, window_bounds = array<i64: 8, 128>}, {transform_indices = @transform_6, window_bounds = array<i64: 8, 128>}]} {
    %c0 = arith.constant 0 : index
    %c0_0 = arith.constant 0 : index
    %0 = vector.load %arg1[%c0, %c0_0] : memref<8x128xbf16, #tpu.memory_space<vmem>>, vector<8x128xbf16>
    %c0_1 = arith.constant 0 : index
    %c0_2 = arith.constant 0 : index
    %1 = vector.load %arg6[%c0_1, %c0_2] : memref<8x128xf32, #tpu.memory_space<vmem>>, vector<8x128xf32>
    %2 = vector.extract_strided_slice %1 {offsets = [0, 0], sizes = [1, 128], strides = [1, 1]} : vector<8x128xf32> to vector<1x128xf32>
    %3 = vector.extract_strided_slice %1 {offsets = [1, 0], sizes = [1, 128], strides = [1, 1]} : vector<8x128xf32> to vector<1x128xf32>
    %4 = vector.extract_strided_slice %1 {offsets = [2, 0], sizes = [1, 128], strides = [1, 1]} : vector<8x128xf32> to vector<1x128xf32>
    %5 = vector.extract_strided_slice %1 {offsets = [3, 0], sizes = [1, 128], strides = [1, 1]} : vector<8x128xf32> to vector<1x128xf32>
    %6 = vector.extract_strided_slice %1 {offsets = [4, 0], sizes = [1, 128], strides = [1, 1]} : vector<8x128xf32> to vector<1x128xf32>
    %7 = vector.extract_strided_slice %1 {offsets = [5, 0], sizes = [1, 128], strides = [1, 1]} : vector<8x128xf32> to vector<1x128xf32>
    %8 = vector.extract_strided_slice %1 {offsets = [6, 0], sizes = [1, 128], strides = [1, 1]} : vector<8x128xf32> to vector<1x128xf32>
    %9 = vector.extract_strided_slice %1 {offsets = [7, 0], sizes = [1, 128], strides = [1, 1]} : vector<8x128xf32> to vector<1x128xf32>
    %c0_3 = arith.constant 0 : index
    %c0_4 = arith.constant 0 : index
    %10 = vector.load %arg2[%c0_3, %c0_4] : memref<128x128xbf16, #tpu.memory_space<vmem>>, vector<128x128xbf16>
    %cst = arith.constant dense<0.000000e+00> : vector<8x128xf32>
    %11 = tpu.matmul %0, %10, %cst {dimension_numbers = #tpu.dot_dimension_numbers<[1], [0], [0], [1], [0, 0, 1, 1], [], []>} : vector<8x128xbf16>, vector<128x128xbf16>, vector<8x128xf32> -> vector<8x128xf32>
    %12 = vector.broadcast %2 : vector<1x128xf32> to vector<8x128xf32>
    %13 = arith.addf %11, %12 : vector<8x128xf32>
    %cst_5 = arith.constant dense<0.000000e+00> : vector<8xf32>
    %14 = vector.multi_reduction <add>, %13, %cst_5 [1] : vector<8x128xf32> to vector<8xf32>
    %15 = vector.shape_cast %14 : vector<8xf32> to vector<8x1xf32>
    %cst_6 = arith.constant 0.0416666679 : f32
    %16 = vector.broadcast %cst_6 : f32 to vector<8x1xf32>
    %17 = arith.mulf %15, %16 : vector<8x1xf32>
    %18 = vector.broadcast %17 : vector<8x1xf32> to vector<8x128xf32>
    %19 = arith.subf %13, %18 : vector<8x128xf32>
    %20 = arith.mulf %19, %19 : vector<8x128xf32>
    %cst_7 = arith.constant dense<0.000000e+00> : vector<8xf32>
    %21 = vector.multi_reduction <add>, %20, %cst_7 [1] : vector<8x128xf32> to vector<8xf32>
    %22 = vector.shape_cast %21 : vector<8xf32> to vector<8x1xf32>
    %23 = arith.mulf %17, %17 : vector<8x1xf32>
    %cst_8 = arith.constant 1.040000e+02 : f32
    %24 = vector.broadcast %cst_8 : f32 to vector<8x1xf32>
    %25 = arith.mulf %24, %23 : vector<8x1xf32>
    %26 = arith.subf %22, %25 : vector<8x1xf32>
    %cst_9 = arith.constant 0.0416666679 : f32
    %27 = vector.broadcast %cst_9 : f32 to vector<8x1xf32>
    %28 = arith.mulf %26, %27 : vector<8x1xf32>
    %cst_10 = arith.constant 9.99999974E-6 : f32
    %29 = vector.broadcast %cst_10 : f32 to vector<8x1xf32>
    %30 = arith.addf %28, %29 : vector<8x1xf32>
    %31 = math.rsqrt %30 : vector<8x1xf32>
    %32 = vector.broadcast %31 : vector<8x1xf32> to vector<8x128xf32>
    %33 = arith.mulf %19, %32 : vector<8x128xf32>
    %34 = vector.broadcast %3 : vector<1x128xf32> to vector<8x128xf32>
    %35 = arith.mulf %33, %34 : vector<8x128xf32>
    %36 = vector.broadcast %4 : vector<1x128xf32> to vector<8x128xf32>
    %37 = arith.addf %35, %36 : vector<8x128xf32>
    %cst_11 = arith.constant 2.000000e+01 : f32
    %38 = vector.broadcast %cst_11 : f32 to vector<8x128xf32>
    %39 = arith.minimumf %37, %38 : vector<8x128xf32>
    %40 = math.exp %39 : vector<8x128xf32>
    %cst_12 = arith.constant 1.000000e+00 : f32
    %41 = vector.broadcast %cst_12 : f32 to vector<8x128xf32>
    %42 = arith.addf %41, %40 : vector<8x128xf32>
    %cst_13 = arith.constant 1.000000e+00 : f32
    %43 = vector.broadcast %cst_13 : f32 to vector<8x128xf32>
    %44 = arith.addf %43, %40 : vector<8x128xf32>
    %45 = arith.mulf %42, %44 : vector<8x128xf32>
    %cst_14 = arith.constant 1.000000e+00 : f32
    %46 = vector.broadcast %cst_14 : f32 to vector<8x128xf32>
    %47 = arith.subf %45, %46 : vector<8x128xf32>
    %48 = arith.mulf %37, %47 : vector<8x128xf32>
    %cst_15 = arith.constant 1.000000e+00 : f32
    %49 = vector.broadcast %cst_15 : f32 to vector<8x128xf32>
    %50 = arith.addf %45, %49 : vector<8x128xf32>
    %51 = tpu.reciprocal %50 {approx = true} : vector<8x128xf32> -> vector<8x128xf32>
    %52 = arith.mulf %48, %51 : vector<8x128xf32>
    %53 = arith.truncf %52 : vector<8x128xf32> to vector<8x128xbf16>
    %c0_16 = arith.constant 0 : index
    %c0_17 = arith.constant 0 : index
    %54 = vector.load %arg3[%c0_16, %c0_17] : memref<128x128xbf16, #tpu.memory_space<vmem>>, vector<128x128xbf16>
    %cst_18 = arith.constant dense<0.000000e+00> : vector<8x128xf32>
    %55 = tpu.matmul %53, %54, %cst_18 {dimension_numbers = #tpu.dot_dimension_numbers<[1], [0], [0], [1], [0, 0, 1, 1], [], []>} : vector<8x128xbf16>, vector<128x128xbf16>, vector<8x128xf32> -> vector<8x128xf32>
    %56 = vector.broadcast %5 : vector<1x128xf32> to vector<8x128xf32>
    %57 = arith.addf %55, %56 : vector<8x128xf32>
    %58 = arith.truncf %57 : vector<8x128xf32> to vector<8x128xbf16>
    %c0_19 = arith.constant 0 : index
    %c0_20 = arith.constant 0 : index
    %59 = vector.load %arg4[%c0_19, %c0_20] : memref<128x128xbf16, #tpu.memory_space<vmem>>, vector<128x128xbf16>
    %cst_21 = arith.constant dense<0.000000e+00> : vector<8x128xf32>
    %60 = tpu.matmul %58, %59, %cst_21 {dimension_numbers = #tpu.dot_dimension_numbers<[1], [0], [0], [1], [0, 0, 1, 1], [], []>} : vector<8x128xbf16>, vector<128x128xbf16>, vector<8x128xf32> -> vector<8x128xf32>
    %61 = vector.broadcast %6 : vector<1x128xf32> to vector<8x128xf32>
    %62 = arith.addf %60, %61 : vector<8x128xf32>
    %cst_22 = arith.constant dense<0.000000e+00> : vector<8xf32>
    %63 = vector.multi_reduction <add>, %62, %cst_22 [1] : vector<8x128xf32> to vector<8xf32>
    %64 = vector.shape_cast %63 : vector<8xf32> to vector<8x1xf32>
    %cst_23 = arith.constant 0.0416666679 : f32
    %65 = vector.broadcast %cst_23 : f32 to vector<8x1xf32>
    %66 = arith.mulf %64, %65 : vector<8x1xf32>
    %67 = vector.broadcast %66 : vector<8x1xf32> to vector<8x128xf32>
    %68 = arith.subf %62, %67 : vector<8x128xf32>
    %69 = arith.mulf %68, %68 : vector<8x128xf32>
    %cst_24 = arith.constant dense<0.000000e+00> : vector<8xf32>
    %70 = vector.multi_reduction <add>, %69, %cst_24 [1] : vector<8x128xf32> to vector<8xf32>
    %71 = vector.shape_cast %70 : vector<8xf32> to vector<8x1xf32>
    %72 = arith.mulf %66, %66 : vector<8x1xf32>
    %cst_25 = arith.constant 1.040000e+02 : f32
    %73 = vector.broadcast %cst_25 : f32 to vector<8x1xf32>
    %74 = arith.mulf %73, %72 : vector<8x1xf32>
    %75 = arith.subf %71, %74 : vector<8x1xf32>
    %cst_26 = arith.constant 0.0416666679 : f32
    %76 = vector.broadcast %cst_26 : f32 to vector<8x1xf32>
    %77 = arith.mulf %75, %76 : vector<8x1xf32>
    %cst_27 = arith.constant 9.99999974E-6 : f32
    %78 = vector.broadcast %cst_27 : f32 to vector<8x1xf32>
    %79 = arith.addf %77, %78 : vector<8x1xf32>
    %80 = math.rsqrt %79 : vector<8x1xf32>
    %81 = vector.broadcast %80 : vector<8x1xf32> to vector<8x128xf32>
    %82 = arith.mulf %68, %81 : vector<8x128xf32>
    %83 = vector.broadcast %7 : vector<1x128xf32> to vector<8x128xf32>
    %84 = arith.mulf %82, %83 : vector<8x128xf32>
    %85 = vector.broadcast %8 : vector<1x128xf32> to vector<8x128xf32>
    %86 = arith.addf %84, %85 : vector<8x128xf32>
    %cst_28 = arith.constant 2.000000e+01 : f32
    %87 = vector.broadcast %cst_28 : f32 to vector<8x128xf32>
    %88 = arith.minimumf %86, %87 : vector<8x128xf32>
    %89 = math.exp %88 : vector<8x128xf32>
    %cst_29 = arith.constant 1.000000e+00 : f32
    %90 = vector.broadcast %cst_29 : f32 to vector<8x128xf32>
    %91 = arith.addf %90, %89 : vector<8x128xf32>
    %cst_30 = arith.constant 1.000000e+00 : f32
    %92 = vector.broadcast %cst_30 : f32 to vector<8x128xf32>
    %93 = arith.addf %92, %89 : vector<8x128xf32>
    %94 = arith.mulf %91, %93 : vector<8x128xf32>
    %cst_31 = arith.constant 1.000000e+00 : f32
    %95 = vector.broadcast %cst_31 : f32 to vector<8x128xf32>
    %96 = arith.subf %94, %95 : vector<8x128xf32>
    %97 = arith.mulf %86, %96 : vector<8x128xf32>
    %cst_32 = arith.constant 1.000000e+00 : f32
    %98 = vector.broadcast %cst_32 : f32 to vector<8x128xf32>
    %99 = arith.addf %94, %98 : vector<8x128xf32>
    %100 = tpu.reciprocal %99 {approx = true} : vector<8x128xf32> -> vector<8x128xf32>
    %101 = arith.mulf %97, %100 : vector<8x128xf32>
    %102 = arith.truncf %101 : vector<8x128xf32> to vector<8x128xbf16>
    %c0_33 = arith.constant 0 : index
    %c0_34 = arith.constant 0 : index
    %103 = vector.load %arg5[%c0_33, %c0_34] : memref<128x128xbf16, #tpu.memory_space<vmem>>, vector<128x128xbf16>
    %cst_35 = arith.constant dense<0.000000e+00> : vector<8x128xf32>
    %104 = tpu.matmul %102, %103, %cst_35 {dimension_numbers = #tpu.dot_dimension_numbers<[1], [0], [0], [1], [0, 0, 1, 1], [], []>} : vector<8x128xbf16>, vector<128x128xbf16>, vector<8x128xf32> -> vector<8x128xf32>
    %105 = vector.broadcast %9 : vector<1x128xf32> to vector<8x128xf32>
    %106 = arith.addf %104, %105 : vector<8x128xf32>
    %107 = arith.truncf %106 : vector<8x128xf32> to vector<8x128xbf16>
    %c0_36 = arith.constant 0 : index
    %c0_37 = arith.constant 0 : index
    %108 = vector.load %arg7[%c0_36, %c0_37] : memref<8x128xbf16, #tpu.memory_space<vmem>>, vector<8x128xbf16>
    tpu.vector_store %arg7[%c0_36, %c0_37], %107 {strides = array<i32>} : memref<8x128xbf16, #tpu.memory_space<vmem>>, vector<8x128xbf16>,
    return
  }
  func.func @transform_0(%arg0: i32) -> (i32, i32) {
    %c0_i32 = arith.constant 0 : i32
    %c0_i32_0 = arith.constant 0 : i32
    return %arg0, %c0_i32 : i32, i32
  }
  func.func @transform_1(%arg0: i32) -> (i32, i32) {
    %c0_i32 = arith.constant 0 : i32
    %c0_i32_0 = arith.constant 0 : i32
    %c0_i32_1 = arith.constant 0 : i32
    return %c0_i32, %c0_i32_0 : i32, i32
  }
  func.func @transform_2(%arg0: i32) -> (i32, i32) {
    %c0_i32 = arith.constant 0 : i32
    %c0_i32_0 = arith.constant 0 : i32
    %c0_i32_1 = arith.constant 0 : i32
    return %c0_i32, %c0_i32_0 : i32, i32
  }
  func.func @transform_3(%arg0: i32) -> (i32, i32) {
    %c0_i32 = arith.constant 0 : i32
    %c0_i32_0 = arith.constant 0 : i32
    %c0_i32_1 = arith.constant 0 : i32
    return %c0_i32, %c0_i32_0 : i32, i32
  }
  func.func @transform_4(%arg0: i32) -> (i32, i32) {
    %c0_i32 = arith.constant 0 : i32
    %c0_i32_0 = arith.constant 0 : i32
    %c0_i32_1 = arith.constant 0 : i32
    return %c0_i32, %c0_i32_0 : i32, i32
  }
  func.func @transform_5(%arg0: i32) -> (i32, i32) {
    %c0_i32 = arith.constant 0 : i32
    %c0_i32_0 = arith.constant 0 : i32
    %c0_i32_1 = arith.constant 0 : i32
    return %c0_i32, %c0_i32_0 : i32, i32
  }
  func.func @transform_6(%arg0: i32) -> (i32, i32) {
    %c0_i32 = arith.constant 0 : i32
    %c0_i32_0 = arith.constant 0 : i32
    return %arg0, %c0_i32 : i32, i32
  }
}

</mosaic_0001>

<llo_original>
// kernel: tpu_custom_call.1
$region0: #{tpu_custom_call.1}
  #allocation0 [shape = 'u32[]', space=smem, size = 0x4, offset = 0x4, fixed_abs, tag = 'smem constant byte address 0x4 - core index']
  #allocation1 [shape = 'u32[144,128]{1,0:T(1,128)}', space=vmem, size = 0x12000, scoped, tag = 'internal scratch']
  %s0 = inlined_call_operand.hbm [shape: bf16[8,128], index: 0, kind: input, shape index: {}]
  %s1 = inlined_call_operand.hbm [shape: bf16[128,128], index: 1, kind: input, shape index: {}]
  %s2 = inlined_call_operand.hbm [shape: bf16[128,128], index: 2, kind: input, shape index: {}]
  %s3 = inlined_call_operand.hbm [shape: bf16[128,128], index: 3, kind: input, shape index: {}]
  %s4 = inlined_call_operand.hbm [shape: bf16[128,128], index: 4, kind: input, shape index: {}]
  %s5 = inlined_call_operand.vmem [shape: f32[8,128], index: 5, kind: input, shape index: {}]
  %s6 = inlined_call_operand.hbm [shape: bf16[8,128], index: 6, kind: output, shape index: {}]
  %s7 = sld [smem:[#allocation0]]
  $region54: #{tpu_custom_call.1} parent=0
    _
  %s9 = ssub.s32 1, %s7
  %s10 = scalar_select 0, %s9, %s7
  $region1: #{tpu_custom_call.1} parent=0
    #allocation2 [shape = 'u8[2048]{0}', space=vmem, size = 0x800, scoped, tag = 'input window, operand 0, single buffered']
    #allocation3 [shape = 's32[1]{0}', space=sflag, size = 0x4, scoped, tag = 'scoped memory for tpu_custom_call.1']
    #allocation4 [shape = 's32[1]{0}', space=sflag, size = 0x4, scoped, tag = 'scoped memory for tpu_custom_call.1']
    #allocation5 [shape = 'u8[32768]{0}', space=vmem, size = 0x8000, scoped, tag = 'input window, operand 1, single buffered']
    #allocation6 [shape = 's32[1]{0}', space=sflag, size = 0x4, scoped, tag = 'scoped memory for tpu_custom_call.1']
    #allocation7 [shape = 'u8[32768]{0}', space=vmem, size = 0x8000, scoped, tag = 'input window, operand 2, single buffered']
    #allocation8 [shape = 'u8[32768]{0}', space=vmem, size = 0x8000, scoped, tag = 'input window, operand 3, single buffered']
    #allocation9 [shape = 's32[1]{0}', space=sflag, size = 0x4, scoped, tag = 'scoped memory for tpu_custom_call.1']
    #allocation10 [shape = 'u8[32768]{0}', space=vmem, size = 0x8000, scoped, tag = 'input window, operand 4, single buffered']
    #allocation11 [shape = 'u8[2048]{0}', space=vmem, size = 0x800, scoped, tag = 'output window, operand 0, single buffered']
    %11 = vsyncpa [#allocation3], 0
    %12 = vsyncpa [#allocation6], 0
    %13 = vsyncpa [#allocation9], 0
    %14 = vsyncpa [#allocation4], 0
    // Predicated region
    $region2: #{tpu_custom_call.1} parent=1 // pred_check
      _
    $region3: #{tpu_custom_call.1} parent=1 // pred_check_branch
      %16 = sbr.rel (0) target = $region5
    $region4: #{tpu_custom_call.1} parent=1 // pred_region
      %s18 = ssub.s32 64, 64
      %19 = vsyncadd [#allocation3], %s18
      %s21 = sshll.u32 [#allocation2], 4
      %s22 = int_to_ptr.vmem [resolvable:$true] %s21
      %24 = dma.hbm_to_vmem [thread:$0]  %s0, 64, %s22, [#allocation3]
    $region5: #{tpu_custom_call.1} parent=1 // pred_fallthru
      _
    // Predicated region
    $region6: #{tpu_custom_call.1} parent=1 // pred_check
      _
    $region7: #{tpu_custom_call.1} parent=1 // pred_check_branch
      %26 = sbr.rel (0) target = $region9
    $region8: #{tpu_custom_call.1} parent=1 // pred_region
      %s28 = ssub.s32 1024, 1024
      %29 = vsyncadd [#allocation6], %s28
      %s30 = sshll.u32 [#allocation5], 4
      %s31 = int_to_ptr.vmem [resolvable:$true] %s30
      %36 = dma.hbm_to_vmem [thread:$0]  %s1, 1024, %s31, [#allocation6], 64, 64, 4
    $region9: #{tpu_custom_call.1} parent=1 // pred_fallthru
      _
    // Predicated region
    $region10: #{tpu_custom_call.1} parent=1 // pred_check
      _
    $region11: #{tpu_custom_call.1} parent=1 // pred_check_branch
      %38 = sbr.rel (0) target = $region13
    $region12: #{tpu_custom_call.1} parent=1 // pred_region
      %s40 = ssub.s32 1024, 1024
      %41 = vsyncadd [#allocation6], %s40
      %s42 = sshll.u32 [#allocation7], 4
      %s43 = int_to_ptr.vmem [resolvable:$true] %s42
      %48 = dma.hbm_to_vmem [thread:$0]  %s2, 1024, %s43, [#allocation6], 64, 64, 4
    $region13: #{tpu_custom_call.1} parent=1 // pred_fallthru
      _
    // Predicated region
    $region14: #{tpu_custom_call.1} parent=1 // pred_check
      _
    $region15: #{tpu_custom_call.1} parent=1 // pred_check_branch
      %50 = sbr.rel (0) target = $region17
    $region16: #{tpu_custom_call.1} parent=1 // pred_region
      %s52 = ssub.s32 1024, 1024
      %53 = vsyncadd [#allocation9], %s52
      %s54 = sshll.u32 [#allocation8], 4
      %s55 = int_to_ptr.vmem [resolvable:$true] %s54
      %60 = dma.hbm_to_vmem [thread:$0]  %s3, 1024, %s55, [#allocation9], 64, 64, 4
    $region17: #{tpu_custom_call.1} parent=1 // pred_fallthru
      _
    // Predicated region
    $region18: #{tpu_custom_call.1} parent=1 // pred_check
      _
    $region19: #{tpu_custom_call.1} parent=1 // pred_check_branch
      %62 = sbr.rel (0) target = $region21
    $region20: #{tpu_custom_call.1} parent=1 // pred_region
      %s64 = ssub.s32 1024, 1024
      %65 = vsyncadd [#allocation9], %s64
      %s66 = sshll.u32 [#allocation10], 4
      %s67 = int_to_ptr.vmem [resolvable:$true] %s66
      %72 = dma.hbm_to_vmem [thread:$0]  %s4, 1024, %s67, [#allocation9], 64, 64, 4
    $region21: #{tpu_custom_call.1} parent=1 // pred_fallthru
      _
    // Predicated region
    $region22: #{tpu_custom_call.1} parent=1 // pred_check
      _
    $region23: #{tpu_custom_call.1} parent=1 // pred_check_branch
      %74 = sbr.rel (0) target = $region25
    $region24: #{tpu_custom_call.1} parent=1 // pred_region
      _
    $region25: #{tpu_custom_call.1} parent=1 // pred_fallthru
      _
    // Predicated region
    $region26: #{tpu_custom_call.1} parent=1 // pred_check
      _
    $region27: #{tpu_custom_call.1} parent=1 // pred_check_branch
      %76 = sbr.rel (0) target = $region29
    $region28: #{tpu_custom_call.1} parent=1 // pred_region
      %77 = dma.done [#allocation3], 64
    $region29: #{tpu_custom_call.1} parent=1 // pred_fallthru
      _
    // Predicated region
    $region30: #{tpu_custom_call.1} parent=1 // pred_check
      _
    $region31: #{tpu_custom_call.1} parent=1 // pred_check_branch
      %79 = sbr.rel (0) target = $region33
    $region32: #{tpu_custom_call.1} parent=1 // pred_region
      %80 = dma.done [#allocation6], 1024
    $region33: #{tpu_custom_call.1} parent=1 // pred_fallthru
      _
    // Predicated region
    $region34: #{tpu_custom_call.1} parent=1 // pred_check
      _
    $region35: #{tpu_custom_call.1} parent=1 // pred_check_branch
      %82 = sbr.rel (0) target = $region37
    $region36: #{tpu_custom_call.1} parent=1 // pred_region
      %83 = dma.done [#allocation6], 1024
    $region37: #{tpu_custom_call.1} parent=1 // pred_fallthru
      _
    // Predicated region
    $region38: #{tpu_custom_call.1} parent=1 // pred_check
      _
    $region39: #{tpu_custom_call.1} parent=1 // pred_check_branch
      %85 = sbr.rel (0) target = $region41
    $region40: #{tpu_custom_call.1} parent=1 // pred_region
      %86 = dma.done [#allocation9], 1024
    $region41: #{tpu_custom_call.1} parent=1 // pred_fallthru
      _
    // Predicated region
    $region42: #{tpu_custom_call.1} parent=1 // pred_check
      _
    $region43: #{tpu_custom_call.1} parent=1 // pred_check_branch
      %88 = sbr.rel (0) target = $region45
    $region44: #{tpu_custom_call.1} parent=1 // pred_region
      %89 = dma.done [#allocation9], 1024
    $region45: #{tpu_custom_call.1} parent=1 // pred_fallthru
      _
    %v91 = vld [vmem:[#allocation2] sm:$0xf]
    %v92 = vld [vmem:[%s5] sm:$0xff]
    %v93 = vld [vmem:[#allocation5] sm:$0xf]
    %v94 = vld [vmem:[#allocation5 + $0x4] sm:$0xf]
    %v95 = vld [vmem:[#allocation5 + $0x8] sm:$0xf]
    %v96 = vld [vmem:[#allocation5 + $0xc] sm:$0xf]
    %v97 = vld [vmem:[#allocation5 + $0x10] sm:$0xf]
    %v98 = vld [vmem:[#allocation5 + $0x14] sm:$0xf]
    %v99 = vld [vmem:[#allocation5 + $0x18] sm:$0xf]
    %v100 = vld [vmem:[#allocation5 + $0x1c] sm:$0xf]
    %v101 = vld [vmem:[#allocation5 + $0x20] sm:$0xf]
    %v102 = vld [vmem:[#allocation5 + $0x24] sm:$0xf]
    %v103 = vld [vmem:[#allocation5 + $0x28] sm:$0xf]
    %v104 = vld [vmem:[#allocation5 + $0x2c] sm:$0xf]
    %v105 = vld [vmem:[#allocation5 + $0x30] sm:$0xf]
    %v106 = vld [vmem:[#allocation5 + $0x34] sm:$0xf]
    %v107 = vld [vmem:[#allocation5 + $0x38] sm:$0xf]
    %v108 = vld [vmem:[#allocation5 + $0x3c] sm:$0xf]
    %v109 = vlaneseq
    %v110 = vshrl.u32 %v109, 7
    %v111 = vsub.s32 0, %v110
    %v112 = vrot.slane %v92, %v111
    %v129 = vunpack.c.l.b16 %v93
    %v130 = vunpack.c.l.b16 %v94
    %v131 = vunpack.c.l.b16 %v95
    %v132 = vunpack.c.l.b16 %v96
    %v133 = vunpack.c.l.b16 %v97
    %v134 = vunpack.c.l.b16 %v98
    %v135 = vunpack.c.l.b16 %v99
    %v136 = vunpack.c.l.b16 %v100
    %v137 = vunpack.c.l.b16 %v101
    %v138 = vunpack.c.l.b16 %v102
    %v139 = vunpack.c.l.b16 %v103
    %v140 = vunpack.c.l.b16 %v104
    %v141 = vunpack.c.l.b16 %v105
    %v142 = vunpack.c.l.b16 %v106
    %v143 = vunpack.c.l.b16 %v107
    %v144 = vunpack.c.l.b16 %v108
    %v145 = vpack.c.b16 %v130, %v129
    %v146 = vpack.c.b16 %v132, %v131
    %v147 = vpack.c.b16 %v134, %v133
    %v148 = vpack.c.b16 %v136, %v135
    %v149 = vpack.c.b16 %v138, %v137
    %v150 = vpack.c.b16 %v140, %v139
    %v151 = vpack.c.b16 %v142, %v141
    %v152 = vpack.c.b16 %v144, %v143
    %161 = vmatprep.subr.bf16.mxu0 0
    %162 = vmatpush1.bf16.msra.mxu0 %v145
    %163 = vmatprep.subr.bf16.mxu0 0
    %164 = vmatpush1.bf16.msra.mxu0 %v146
    %165 = vmatprep.subr.bf16.mxu0 0
    %166 = vmatpush1.bf16.msra.mxu0 %v147
    %167 = vmatprep.subr.bf16.mxu0 0
    %168 = vmatpush1.bf16.msra.mxu0 %v148
    %169 = vmatprep.subr.bf16.mxu0 0
    %170 = vmatpush1.bf16.msra.mxu0 %v149
    %171 = vmatprep.subr.bf16.mxu0 0
    %172 = vmatpush1.bf16.msra.mxu0 %v150
    %173 = vmatprep.subr.bf16.mxu0 0
    %174 = vmatpush1.bf16.msra.mxu0 %v151
    %175 = vmatprep.subr.bf16.mxu0 0
    %176 = vmatpush1.bf16.msra.mxu0 %v152
    %177 = vmatprep.subr.bf16.mxu0 0
    %178 = vmatpush1.bf16.msra.mxu0 0
    %179 = vmatprep.subr.bf16.mxu0 0
    %180 = vmatpush1.bf16.msra.mxu0 0
    %181 = vmatprep.subr.bf16.mxu0 0
    %182 = vmatpush1.bf16.msra.mxu0 0
    %183 = vmatprep.subr.bf16.mxu0 0
    %184 = vmatpush1.bf16.msra.mxu0 0
    %185 = vmatprep.subr.bf16.mxu0 0
    %186 = vmatpush1.bf16.msra.mxu0 0
    %187 = vmatprep.subr.bf16.mxu0 0
    %188 = vmatpush1.bf16.msra.mxu0 0
    %189 = vmatprep.subr.bf16.mxu0 0
    %190 = vmatpush1.bf16.msra.mxu0 0
    %191 = vmatprep.subr.bf16.mxu0 0
    %192 = vmatpush1.bf16.msra.mxu0 0
    %193 = vmatprep.mubr.bf16.mxu0 0
    %194 = vmatmul.mubr.bf16.gmra.mrb[0].mxu0 %v91
    %v195 = vpop.f32.mrb[0].mxu0
    %v196 = vadd.f32 %v112, %v195
    %v197 = vpop.f32.mrb[0].mxu0
    %v198 = vpop.f32.mrb[0].mxu0
    %v199 = vpop.f32.mrb[0].mxu0
    %200 = vdwg.mxu0
    %201 = vadd.xlane.f32.xlu0 %v196
    %v202 = vpop.xlane.xlu0 %201
    %v203 = vmul.f32 %v202, 0.041666668
    %v204 = vsub.f32 %v196, %v203
    %v205 = vmul.f32 %v204, %v204
    %206 = vadd.xlane.f32.xlu0 %v205
    %v207 = vpop.xlane.xlu0 %206
    %v208 = vmul.f32 %v203, %v203
    %v209 = vmul.f32 %v208, 104.0
    %v210 = vsub.f32 %v207, %v209
    %v211 = vmul.f32 %v210, 0.041666668
    %v212 = vadd.f32 %v211, 1e-05
    %v213 = vrsqrt.pop %v212
    %v214 = vmul.f32 %v204, %v213
    %v215 = vlaneseq
    %v216 = vshrl.u32 %v215, 7
    %v217 = vsub.s32 1, %v216
    %v218 = vrot.slane %v92, %v217
    %v219 = vmul.f32 %v214, %v218
    %v220 = vlaneseq
    %v221 = vshrl.u32 %v220, 7
    %v222 = vsub.s32 2, %v221
    %v223 = vrot.slane %v92, %v222
    %v224 = vadd.f32 %v219, %v223
    %v225 = vmin.f32 %v224, 20.0
    %v226 = vmul.f32 %v225, 1.442695
    %v227 = vpow.pop %v226
    %v228 = vadd.f32 %v227, 1.0
    %v229 = vmul.f32 %v228, %v228
    %v230 = vsub.f32 %v229, 1.0
    %v231 = vmul.f32 %v224, %v230
    %v232 = vadd.f32 %v229, 1.0
    %v233 = vrcp.pop %v232
    %v234 = vmul.f32 %v231, %v233
    %v235 = vpack.c.bf16 %v234, %v234
    %v236 = vld [vmem:[#allocation7] sm:$0xf]
    %v237 = vld [vmem:[#allocation7 + $0x4] sm:$0xf]
    %v238 = vld [vmem:[#allocation7 + $0x8] sm:$0xf]
    %v239 = vld [vmem:[#allocation7 + $0xc] sm:$0xf]
    %v240 = vld [vmem:[#allocation7 + $0x10] sm:$0xf]
    %v241 = vld [vmem:[#allocation7 + $0x14] sm:$0xf]
    %v242 = vld [vmem:[#allocation7 + $0x18] sm:$0xf]
    %v243 = vld [vmem:[#allocation7 + $0x1c] sm:$0xf]
    %v244 = vld [vmem:[#allocation7 + $0x20] sm:$0xf]
    %v245 = vld [vmem:[#allocation7 + $0x24] sm:$0xf]
    %v246 = vld [vmem:[#allocation7 + $0x28] sm:$0xf]
    %v247 = vld [vmem:[#allocation7 + $0x2c] sm:$0xf]
    %v248 = vld [vmem:[#allocation7 + $0x30] sm:$0xf]
    %v249 = vld [vmem:[#allocation7 + $0x34] sm:$0xf]
    %v250 = vld [vmem:[#allocation7 + $0x38] sm:$0xf]
    %v251 = vld [vmem:[#allocation7 + $0x3c] sm:$0xf]
    %v252 = vlaneseq
    %v253 = vshrl.u32 %v252, 7
    %v254 = vsub.s32 3, %v253
    %v255 = vrot.slane %v92, %v254
    %v272 = vunpack.c.l.b16 %v236
    %v273 = vunpack.c.l.b16 %v237
    %v274 = vunpack.c.l.b16 %v238
    %v275 = vunpack.c.l.b16 %v239
    %v276 = vunpack.c.l.b16 %v240
    %v277 = vunpack.c.l.b16 %v241
    %v278 = vunpack.c.l.b16 %v242
    %v279 = vunpack.c.l.b16 %v243
    %v280 = vunpack.c.l.b16 %v244
    %v281 = vunpack.c.l.b16 %v245
    %v282 = vunpack.c.l.b16 %v246
    %v283 = vunpack.c.l.b16 %v247
    %v284 = vunpack.c.l.b16 %v248
    %v285 = vunpack.c.l.b16 %v249
    %v286 = vunpack.c.l.b16 %v250
    %v287 = vunpack.c.l.b16 %v251
    %v288 = vpack.c.b16 %v273, %v272
    %v289 = vpack.c.b16 %v275, %v274
    %v290 = vpack.c.b16 %v277, %v276
    %v291 = vpack.c.b16 %v279, %v278
    %v292 = vpack.c.b16 %v281, %v280
    %v293 = vpack.c.b16 %v283, %v282
    %v294 = vpack.c.b16 %v285, %v284
    %v295 = vpack.c.b16 %v287, %v286
    %304 = vmatprep.subr.bf16.mxu0 0
    %305 = vmatpush1.bf16.msra.mxu0 %v288
    %306 = vmatprep.subr.bf16.mxu0 0
    %307 = vmatpush1.bf16.msra.mxu0 %v289
    %308 = vmatprep.subr.bf16.mxu0 0
    %309 = vmatpush1.bf16.msra.mxu0 %v290
    %310 = vmatprep.subr.bf16.mxu0 0
    %311 = vmatpush1.bf16.msra.mxu0 %v291
    %312 = vmatprep.subr.bf16.mxu0 0
    %313 = vmatpush1.bf16.msra.mxu0 %v292
    %314 = vmatprep.subr.bf16.mxu0 0
    %315 = vmatpush1.bf16.msra.mxu0 %v293
    %316 = vmatprep.subr.bf16.mxu0 0
    %317 = vmatpush1.bf16.msra.mxu0 %v294
    %318 = vmatprep.subr.bf16.mxu0 0
    %319 = vmatpush1.bf16.msra.mxu0 %v295
    %320 = vmatprep.subr.bf16.mxu0 0
    %321 = vmatpush1.bf16.msra.mxu0 0
    %322 = vmatprep.subr.bf16.mxu0 0
    %323 = vmatpush1.bf16.msra.mxu0 0
    %324 = vmatprep.subr.bf16.mxu0 0
    %325 = vmatpush1.bf16.msra.mxu0 0
    %326 = vmatprep.subr.bf16.mxu0 0
    %327 = vmatpush1.bf16.msra.mxu0 0
    %328 = vmatprep.subr.bf16.mxu0 0
    %329 = vmatpush1.bf16.msra.mxu0 0
    %330 = vmatprep.subr.bf16.mxu0 0
    %331 = vmatpush1.bf16.msra.mxu0 0
    %332 = vmatprep.subr.bf16.mxu0 0
    %333 = vmatpush1.bf16.msra.mxu0 0
    %334 = vmatprep.subr.bf16.mxu0 0
    %335 = vmatpush1.bf16.msra.mxu0 0
    %336 = vmatprep.mubr.bf16.mxu0 0
    %337 = vmatmul.mubr.bf16.gmra.mrb[0].mxu0 %v235
    %v338 = vpop.f32.mrb[0].mxu0
    %v339 = vadd.f32 %v255, %v338
    %v340 = vpop.f32.mrb[0].mxu0
    %v341 = vpop.f32.mrb[0].mxu0
    %v342 = vpop.f32.mrb[0].mxu0
    %343 = vdwg.mxu0
    %v344 = vpack.c.bf16 %v339, %v339
    %v345 = vld [vmem:[#allocation8] sm:$0xf]
    %v346 = vld [vmem:[#allocation8 + $0x4] sm:$0xf]
    %v347 = vld [vmem:[#allocation8 + $0x8] sm:$0xf]
    %v348 = vld [vmem:[#allocation8 + $0xc] sm:$0xf]
    %v349 = vld [vmem:[#allocation8 + $0x10] sm:$0xf]
    %v350 = vld [vmem:[#allocation8 + $0x14] sm:$0xf]
    %v351 = vld [vmem:[#allocation8 + $0x18] sm:$0xf]
    %v352 = vld [vmem:[#allocation8 + $0x1c] sm:$0xf]
    %v353 = vld [vmem:[#allocation8 + $0x20] sm:$0xf]
    %v354 = vld [vmem:[#allocation8 + $0x24] sm:$0xf]
    %v355 = vld [vmem:[#allocation8 + $0x28] sm:$0xf]
    %v356 = vld [vmem:[#allocation8 + $0x2c] sm:$0xf]
    %v357 = vld [vmem:[#allocation8 + $0x30] sm:$0xf]
    %v358 = vld [vmem:[#allocation8 + $0x34] sm:$0xf]
    %v359 = vld [vmem:[#allocation8 + $0x38] sm:$0xf]
    %v360 = vld [vmem:[#allocation8 + $0x3c] sm:$0xf]
    %v361 = vlaneseq
    %v362 = vshrl.u32 %v361, 7
    %v363 = vsub.s32 4, %v362
    %v364 = vrot.slane %v92, %v363
    %v381 = vunpack.c.l.b16 %v345
    %v382 = vunpack.c.l.b16 %v346
    %v383 = vunpack.c.l.b16 %v347
    %v384 = vunpack.c.l.b16 %v348
    %v385 = vunpack.c.l.b16 %v349
    %v386 = vunpack.c.l.b16 %v350
    %v387 = vunpack.c.l.b16 %v351
    %v388 = vunpack.c.l.b16 %v352
    %v389 = vunpack.c.l.b16 %v353
    %v390 = vunpack.c.l.b16 %v354
    %v391 = vunpack.c.l.b16 %v355
    %v392 = vunpack.c.l.b16 %v356
    %v393 = vunpack.c.l.b16 %v357
    %v394 = vunpack.c.l.b16 %v358
    %v395 = vunpack.c.l.b16 %v359
    %v396 = vunpack.c.l.b16 %v360
    %v397 = vpack.c.b16 %v382, %v381
    %v398 = vpack.c.b16 %v384, %v383
    %v399 = vpack.c.b16 %v386, %v385
    %v400 = vpack.c.b16 %v388, %v387
    %v401 = vpack.c.b16 %v390, %v389
    %v402 = vpack.c.b16 %v392, %v391
    %v403 = vpack.c.b16 %v394, %v393
    %v404 = vpack.c.b16 %v396, %v395
    %413 = vmatprep.subr.bf16.mxu0 0
    %414 = vmatpush1.bf16.msra.mxu0 %v397
    %415 = vmatprep.subr.bf16.mxu0 0
    %416 = vmatpush1.bf16.msra.mxu0 %v398
    %417 = vmatprep.subr.bf16.mxu0 0
    %418 = vmatpush1.bf16.msra.mxu0 %v399
    %419 = vmatprep.subr.bf16.mxu0 0
    %420 = vmatpush1.bf16.msra.mxu0 %v400
    %421 = vmatprep.subr.bf16.mxu0 0
    %422 = vmatpush1.bf16.msra.mxu0 %v401
    %423 = vmatprep.subr.bf16.mxu0 0
    %424 = vmatpush1.bf16.msra.mxu0 %v402
    %425 = vmatprep.subr.bf16.mxu0 0
    %426 = vmatpush1.bf16.msra.mxu0 %v403
    %427 = vmatprep.subr.bf16.mxu0 0
    %428 = vmatpush1.bf16.msra.mxu0 %v404
    %429 = vmatprep.subr.bf16.mxu0 0
    %430 = vmatpush1.bf16.msra.mxu0 0
    %431 = vmatprep.subr.bf16.mxu0 0
    %432 = vmatpush1.bf16.msra.mxu0 0
    %433 = vmatprep.subr.bf16.mxu0 0
    %434 = vmatpush1.bf16.msra.mxu0 0
    %435 = vmatprep.subr.bf16.mxu0 0
    %436 = vmatpush1.bf16.msra.mxu0 0
    %437 = vmatprep.subr.bf16.mxu0 0
    %438 = vmatpush1.bf16.msra.mxu0 0
    %439 = vmatprep.subr.bf16.mxu0 0
    %440 = vmatpush1.bf16.msra.mxu0 0
    %441 = vmatprep.subr.bf16.mxu0 0
    %442 = vmatpush1.bf16.msra.mxu0 0
    %443 = vmatprep.subr.bf16.mxu0 0
    %444 = vmatpush1.bf16.msra.mxu0 0
    %445 = vmatprep.mubr.bf16.mxu0 0
    %446 = vmatmul.mubr.bf16.gmra.mrb[0].mxu0 %v344
    %v447 = vpop.f32.mrb[0].mxu0
    %v448 = vadd.f32 %v364, %v447
    %v449 = vpop.f32.mrb[0].mxu0
    %v450 = vpop.f32.mrb[0].mxu0
    %v451 = vpop.f32.mrb[0].mxu0
    %452 = vdwg.mxu0
    %453 = vadd.xlane.f32.xlu0 %v448
    %v454 = vpop.xlane.xlu0 %453
    %v455 = vmul.f32 %v454, 0.041666668
    %v456 = vsub.f32 %v448, %v455
    %v457 = vmul.f32 %v456, %v456
    %458 = vadd.xlane.f32.xlu0 %v457
    %v459 = vpop.xlane.xlu0 %458
    %v460 = vmul.f32 %v455, %v455
    %v461 = vmul.f32 %v460, 104.0
    %v462 = vsub.f32 %v459, %v461
    %v463 = vmul.f32 %v462, 0.041666668
    %v464 = vadd.f32 %v463, 1e-05
    %v465 = vrsqrt.pop %v464
    %v466 = vmul.f32 %v456, %v465
    %v467 = vlaneseq
    %v468 = vshrl.u32 %v467, 7
    %v469 = vsub.s32 5, %v468
    %v470 = vrot.slane %v92, %v469
    %v471 = vmul.f32 %v466, %v470
    %v472 = vlaneseq
    %v473 = vshrl.u32 %v472, 7
    %v474 = vsub.s32 6, %v473
    %v475 = vrot.slane %v92, %v474
    %v476 = vadd.f32 %v471, %v475
    %v477 = vmin.f32 %v476, 20.0
    %v478 = vmul.f32 %v477, 1.442695
    %v479 = vpow.pop %v478
    %v480 = vadd.f32 %v479, 1.0
    %v481 = vmul.f32 %v480, %v480
    %v482 = vsub.f32 %v481, 1.0
    %v483 = vmul.f32 %v476, %v482
    %v484 = vadd.f32 %v481, 1.0
    %v485 = vrcp.pop %v484
    %v486 = vmul.f32 %v483, %v485
    %v487 = vpack.c.bf16 %v486, %v486
    %v488 = vld [vmem:[#allocation10] sm:$0xf]
    %v489 = vld [vmem:[#allocation10 + $0x4] sm:$0xf]
    %v490 = vld [vmem:[#allocation10 + $0x8] sm:$0xf]
    %v491 = vld [vmem:[#allocation10 + $0xc] sm:$0xf]
    %v492 = vld [vmem:[#allocation10 + $0x10] sm:$0xf]
    %v493 = vld [vmem:[#allocation10 + $0x14] sm:$0xf]
    %v494 = vld [vmem:[#allocation10 + $0x18] sm:$0xf]
    %v495 = vld [vmem:[#allocation10 + $0x1c] sm:$0xf]
    %v496 = vld [vmem:[#allocation10 + $0x20] sm:$0xf]
    %v497 = vld [vmem:[#allocation10 + $0x24] sm:$0xf]
    %v498 = vld [vmem:[#allocation10 + $0x28] sm:$0xf]
    %v499 = vld [vmem:[#allocation10 + $0x2c] sm:$0xf]
    %v500 = vld [vmem:[#allocation10 + $0x30] sm:$0xf]
    %v501 = vld [vmem:[#allocation10 + $0x34] sm:$0xf]
    %v502 = vld [vmem:[#allocation10 + $0x38] sm:$0xf]
    %v503 = vld [vmem:[#allocation10 + $0x3c] sm:$0xf]
    %v504 = vlaneseq
    %v505 = vshrl.u32 %v504, 7
    %v506 = vsub.s32 7, %v505
    %v507 = vrot.slane %v92, %v506
    %v524 = vunpack.c.l.b16 %v488
    %v525 = vunpack.c.l.b16 %v489
    %v526 = vunpack.c.l.b16 %v490
    %v527 = vunpack.c.l.b16 %v491
    %v528 = vunpack.c.l.b16 %v492
    %v529 = vunpack.c.l.b16 %v493
    %v530 = vunpack.c.l.b16 %v494
    %v531 = vunpack.c.l.b16 %v495
    %v532 = vunpack.c.l.b16 %v496
    %v533 = vunpack.c.l.b16 %v497
    %v534 = vunpack.c.l.b16 %v498
    %v535 = vunpack.c.l.b16 %v499
    %v536 = vunpack.c.l.b16 %v500
    %v537 = vunpack.c.l.b16 %v501
    %v538 = vunpack.c.l.b16 %v502
    %v539 = vunpack.c.l.b16 %v503
    %v540 = vpack.c.b16 %v525, %v524
    %v541 = vpack.c.b16 %v527, %v526
    %v542 = vpack.c.b16 %v529, %v528
    %v543 = vpack.c.b16 %v531, %v530
    %v544 = vpack.c.b16 %v533, %v532
    %v545 = vpack.c.b16 %v535, %v534
    %v546 = vpack.c.b16 %v537, %v536
    %v547 = vpack.c.b16 %v539, %v538
    %556 = vmatprep.subr.bf16.mxu0 0
    %557 = vmatpush1.bf16.msra.mxu0 %v540
    %558 = vmatprep.subr.bf16.mxu0 0
    %559 = vmatpush1.bf16.msra.mxu0 %v541
    %560 = vmatprep.subr.bf16.mxu0 0
    %561 = vmatpush1.bf16.msra.mxu0 %v542
    %562 = vmatprep.subr.bf16.mxu0 0
    %563 = vmatpush1.bf16.msra.mxu0 %v543
    %564 = vmatprep.subr.bf16.mxu0 0
    %565 = vmatpush1.bf16.msra.mxu0 %v544
    %566 = vmatprep.subr.bf16.mxu0 0
    %567 = vmatpush1.bf16.msra.mxu0 %v545
    %568 = vmatprep.subr.bf16.mxu0 0
    %569 = vmatpush1.bf16.msra.mxu0 %v546
    %570 = vmatprep.subr.bf16.mxu0 0
    %571 = vmatpush1.bf16.msra.mxu0 %v547
    %572 = vmatprep.subr.bf16.mxu0 0
    %573 = vmatpush1.bf16.msra.mxu0 0
    %574 = vmatprep.subr.bf16.mxu0 0
    %575 = vmatpush1.bf16.msra.mxu0 0
    %576 = vmatprep.subr.bf16.mxu0 0
    %577 = vmatpush1.bf16.msra.mxu0 0
    %578 = vmatprep.subr.bf16.mxu0 0
    %579 = vmatpush1.bf16.msra.mxu0 0
    %580 = vmatprep.subr.bf16.mxu0 0
    %581 = vmatpush1.bf16.msra.mxu0 0
    %582 = vmatprep.subr.bf16.mxu0 0
    %583 = vmatpush1.bf16.msra.mxu0 0
    %584 = vmatprep.subr.bf16.mxu0 0
    %585 = vmatpush1.bf16.msra.mxu0 0
    %586 = vmatprep.subr.bf16.mxu0 0
    %587 = vmatpush1.bf16.msra.mxu0 0
    %588 = vmatprep.mubr.bf16.mxu0 0
    %589 = vmatmul.mubr.bf16.gmra.mrb[0].mxu0 %v487
    %v590 = vpop.f32.mrb[0].mxu0
    %v591 = vadd.f32 %v507, %v590
    %v592 = vpop.f32.mrb[0].mxu0
    %v593 = vpop.f32.mrb[0].mxu0
    %v594 = vpop.f32.mrb[0].mxu0
    %595 = vdwg.mxu0
    %v596 = vpack.c.bf16 %v591, %v591
    %597 = vst [vmem:[#allocation11] sm:$0xf] %v596
    // Predicated region
    $region46: #{tpu_custom_call.1} parent=1 // pred_check
      _
    $region47: #{tpu_custom_call.1} parent=1 // pred_check_branch
      %599 = sbr.rel (0) target = $region49
    $region48: #{tpu_custom_call.1} parent=1 // pred_region
      %s601 = ssub.s32 64, 64
      %602 = vsyncadd [#allocation4], %s601
      %s604 = sshll.u32 [#allocation11], 4
      %s605 = int_to_ptr.vmem [resolvable:$true] %s604
      %607 = dma.vmem_to_hbm [thread:$0]  %s605, 64, %s6, [#allocation4]
    $region49: #{tpu_custom_call.1} parent=1 // pred_fallthru
      _
    // Predicated region
    $region50: #{tpu_custom_call.1} parent=1 // pred_check
      _
    $region51: #{tpu_custom_call.1} parent=1 // pred_check_branch
      %609 = sbr.rel (0) target = $region53
    $region52: #{tpu_custom_call.1} parent=1 // pred_region
      %610 = dma.done [#allocation4], 64
    $region53: #{tpu_custom_call.1} parent=1 // pred_fallthru
      _
    %611 = vsyncpa [#allocation3], 1
    %612 = vsyncpa [#allocation6], 1
    %613 = vsyncpa [#allocation9], 1
    %614 = vsyncpa [#allocation4], 1

</llo_original>
